<compile_context>
chip_gen: v6e
topology: v6e:2x2x1
jax: 0.10.0
libtpu: 0.0.40
codegen_flags: <defaults>
</compile_context>

<pallas_src>
import jax
import jax.numpy as jnp
from jax.experimental import pallas as pl
from jax.experimental.pallas import tpu as pltpu


def rates_net_kernel(x_ref, wlr_ref, w1_ref, b1_ref, w2_ref, b2_ref, o_ref):
    # x_ref:  (I, TM)   rows-on-lanes block of the (transposed) input
    # wlr_ref:(I, 1)    LinearRelu weights (column)
    # w1_ref: (N, 1)    torch Linear(1,N) weight, already (N,1)
    # b1_ref: (N, 1)
    # w2_ref: (2, N)    torch Linear(N,2) weight, native (2,N) layout
    # b2_ref: (2, 1)
    # o_ref:  (2, TM)   lane-dense output block
    x = x_ref[...]                                            # (I, TM)

    # LinearRelu (no ReLU applied in the reference forward).
    h = jnp.sum(x * wlr_ref[...], axis=0, keepdims=True)      # (1, TM)

    # Linear(1, N): outer-product style broadcast on the VPU.
    y = w1_ref[...] * h + b1_ref[...]                         # (N, TM)

    # ELU (alpha=1.0); keep as a true select so the inf in the unselected
    # exp branch (for huge positive y) can never leak.
    e = jnp.where(y > 0, y, jnp.exp(y) - 1.0)                 # (N, TM)

    # Linear(N, 2): (2,N)@(N,TM) -> lane-dense (2, TM) output.
    o_ref[...] = (
        jnp.dot(w2_ref[...], e, preferred_element_type=jnp.float32)
        + b2_ref[...]
    )


def _pick_tile(m, max_tm=8192, min_tm=512):
    """Largest power-of-two tile (multiple of 128) up to max_tm covering m."""
    tm = min_tm
    while tm < max_tm and tm < m:
        tm *= 2
    return tm


def rates_net_forward(x, w_lr, w1, b1, w2, b2, *, max_tm=8192):
    """x: (..., I) -> (..., 2).  Parameters use the torch layouts:
    w_lr: (I,), w1: (N, 1), b1: (N,), w2: (2, N), b2: (2,)."""
    lead = x.shape[:-1]
    i_dim = x.shape[-1]
    n_dim = w1.shape[0]

    m = 1
    for d in lead:
        m *= d

    x2 = x.reshape(m, i_dim).astype(jnp.float32)

    tm = _pick_tile(m, max_tm=max_tm)
    m_pad = pl.cdiv(m, tm) * tm
    if m_pad != m:
        x2 = jnp.pad(x2, ((0, m_pad - m), (0, 0)))

    # M-on-lanes layout: feature axis on sublanes, rows on lanes.
    xt = x2.T                                                  # (I, M_pad)

    wlr_c = jnp.asarray(w_lr, jnp.float32).reshape(i_dim, 1)
    w1_c = jnp.asarray(w1, jnp.float32).reshape(n_dim, 1)
    b1_c = jnp.asarray(b1, jnp.float32).reshape(n_dim, 1)
    w2_r = jnp.asarray(w2, jnp.float32).reshape(2, n_dim)
    b2_c = jnp.asarray(b2, jnp.float32).reshape(2, 1)

    grid = (m_pad // tm,)
    out = pl.pallas_call(
        rates_net_kernel,
        out_shape=jax.ShapeDtypeStruct((2, m_pad), jnp.float32),
        grid_spec=pltpu.PrefetchScalarGridSpec(
            num_scalar_prefetch=0,
            grid=grid,
            in_specs=[
                pl.BlockSpec((i_dim, tm), lambda g: (0, g)),   # x tile
                pl.BlockSpec((i_dim, 1), lambda g: (0, 0)),    # w_lr (resident)
                pl.BlockSpec((n_dim, 1), lambda g: (0, 0)),    # w1   (resident)
                pl.BlockSpec((n_dim, 1), lambda g: (0, 0)),    # b1   (resident)
                pl.BlockSpec((2, n_dim), lambda g: (0, 0)),    # w2   (resident)
                pl.BlockSpec((2, 1), lambda g: (0, 0)),        # b2   (resident)
            ],
            out_specs=pl.BlockSpec((2, tm), lambda g: (0, g)),
        ),
        compiler_params=pltpu.CompilerParams(
            dimension_semantics=("parallel",),
            vmem_limit_bytes=32 * 1024 * 1024,
        ),
    )(xt, wlr_c, w1_c, b1_c, w2_r, b2_c)

    out = out.T[:m]                                            # (M, 2)
    return out.reshape(*lead, 2)


def _reference(x, w_lr, w1, b1, w2, b2):
    """Pure-JAX reference with the exact torch-module semantics."""
    h = jnp.sum(x * w_lr, axis=-1, keepdims=True)              # (..., 1)
    y = h * w1.reshape(-1) + b1                                # (..., N)
    e = jnp.where(y > 0, y, jnp.exp(y) - 1.0)                  # ELU
    return e @ w2.T + b2                                       # (..., 2)


if __name__ == "__main__":
    # Small shapes consistent with the module: feature dim I, hidden N.
    B, S, I, N = 2, 8, 32, 32

    key = jax.random.PRNGKey(0)
    kx, k1, kb1, k2, kb2 = jax.random.split(key, 5)

    x = jax.random.normal(kx, (B, S, I), dtype=jnp.float32)

    # LinearRelu weights initialized to ones, as in the module's __init__.
    w_lr = jnp.ones((I,), dtype=jnp.float32)
    # nn.Linear(1, N): torch weight (N, 1), bias (N,)
    w1 = (0.1 * jax.random.normal(k1, (N, 1))).astype(jnp.float32)
    b1 = (0.1 * jax.random.normal(kb1, (N,))).astype(jnp.float32)
    # nn.Linear(N, 2): torch weight (2, N), bias (2,)
    w2 = (0.1 * jax.random.normal(k2, (2, N))).astype(jnp.float32)
    b2 = (0.1 * jax.random.normal(kb2, (2,))).astype(jnp.float32)

    out = rates_net_forward(x, w_lr, w1, b1, w2, b2)
    out = jax.block_until_ready(out)

    ref = _reference(x, w_lr, w1, b1, w2, b2)
    assert out.shape == (B, S, 2), out.shape
    assert jnp.allclose(out, ref, atol=1e-5, rtol=1e-5), "mismatch vs reference"

    print("KERNEL_OK")
</pallas_src>

<mosaic_0001>
module attributes {stable_mosaic.version = 11 : i64} {
  func.func @rates_net_kernel(%arg0: i32, %arg1: memref<32x512xf32, #tpu.memory_space<vmem>>, %arg2: memref<32x1xf32, #tpu.memory_space<vmem>>, %arg3: memref<32x1xf32, #tpu.memory_space<vmem>>, %arg4: memref<32x1xf32, #tpu.memory_space<vmem>>, %arg5: memref<2x32xf32, #tpu.memory_space<vmem>>, %arg6: memref<2x1xf32, #tpu.memory_space<vmem>>, %arg7: memref<2x512xf32, #tpu.memory_space<vmem>>) attributes {dimension_semantics = [#tpu.dimension_semantics<parallel>], iteration_bounds = array<i64: 1>, scalar_prefetch = 0 : i64, scratch_operands = 0 : i64, tpu.core_type = #tpu.core_type<tc>, window_params = [{transform_indices = @transform_0, window_bounds = array<i64: 32, 512>}, {pipeline_mode = #tpu.pipeline_mode<synchronous>, transform_indices = @transform_1, window_bounds = array<i64: 32, 1>}, {pipeline_mode = #tpu.pipeline_mode<synchronous>, transform_indices = @transform_2, window_bounds = array<i64: 32, 1>}, {pipeline_mode = #tpu.pipeline_mode<synchronous>, transform_indices = @transform_3, window_bounds = array<i64: 32, 1>}, {pipeline_mode = #tpu.pipeline_mode<synchronous>, transform_indices = @transform_4, window_bounds = array<i64: 2, 32>}, {pipeline_mode = #tpu.pipeline_mode<synchronous>, transform_indices = @transform_5, window_bounds = array<i64: 2, 1>}, {transform_indices = @transform_6, window_bounds = array<i64: 2, 512>}]} {
    %c0 = arith.constant 0 : index
    %c0_0 = arith.constant 0 : index
    %0 = vector.load %arg1[%c0, %c0_0] : memref<32x512xf32, #tpu.memory_space<vmem>>, vector<32x512xf32>
    %c0_1 = arith.constant 0 : index
    %c0_2 = arith.constant 0 : index
    %1 = vector.load %arg2[%c0_1, %c0_2] : memref<32x1xf32, #tpu.memory_space<vmem>>, vector<32x1xf32>
    %2 = vector.broadcast %1 : vector<32x1xf32> to vector<32x512xf32>
    %3 = arith.mulf %0, %2 : vector<32x512xf32>
    %cst = arith.constant dense<0.000000e+00> : vector<512xf32>
    %4 = vector.multi_reduction <add>, %3, %cst [0] : vector<32x512xf32> to vector<512xf32>
    %5 = vector.shape_cast %4 : vector<512xf32> to vector<1x512xf32>
    %c0_3 = arith.constant 0 : index
    %c0_4 = arith.constant 0 : index
    %6 = vector.load %arg3[%c0_3, %c0_4] : memref<32x1xf32, #tpu.memory_space<vmem>>, vector<32x1xf32>
    %7 = vector.broadcast %6 : vector<32x1xf32> to vector<32x512xf32>
    %8 = vector.broadcast %5 : vector<1x512xf32> to vector<32x512xf32>
    %9 = arith.mulf %7, %8 : vector<32x512xf32>
    %c0_5 = arith.constant 0 : index
    %c0_6 = arith.constant 0 : index
    %10 = vector.load %arg4[%c0_5, %c0_6] : memref<32x1xf32, #tpu.memory_space<vmem>>, vector<32x1xf32>
    %11 = vector.broadcast %10 : vector<32x1xf32> to vector<32x512xf32>
    %12 = arith.addf %9, %11 : vector<32x512xf32>
    %cst_7 = arith.constant 0.000000e+00 : f32
    %13 = vector.broadcast %cst_7 : f32 to vector<32x512xf32>
    %14 = arith.cmpf ogt, %12, %13 : vector<32x512xf32>
    %15 = math.exp %12 : vector<32x512xf32>
    %cst_8 = arith.constant 1.000000e+00 : f32
    %16 = vector.broadcast %cst_8 : f32 to vector<32x512xf32>
    %17 = arith.subf %15, %16 : vector<32x512xf32>
    %18 = arith.select %14, %12, %17 : vector<32x512xi1>, vector<32x512xf32>
    %c0_9 = arith.constant 0 : index
    %c0_10 = arith.constant 0 : index
    %19 = vector.load %arg5[%c0_9, %c0_10] : memref<2x32xf32, #tpu.memory_space<vmem>>, vector<2x32xf32>
    %cst_11 = arith.constant dense<0.000000e+00> : vector<2x512xf32>
    %20 = tpu.matmul %19, %18, %cst_11 {dimension_numbers = #tpu.dot_dimension_numbers<[1], [0], [0], [1], [0, 0, 1, 1], [], []>} : vector<2x32xf32>, vector<32x512xf32>, vector<2x512xf32> -> vector<2x512xf32>
    %c0_12 = arith.constant 0 : index
    %c0_13 = arith.constant 0 : index
    %21 = vector.load %arg6[%c0_12, %c0_13] : memref<2x1xf32, #tpu.memory_space<vmem>>, vector<2x1xf32>
    %22 = vector.broadcast %21 : vector<2x1xf32> to vector<2x512xf32>
    %23 = arith.addf %20, %22 : vector<2x512xf32>
    %c0_14 = arith.constant 0 : index
    %c0_15 = arith.constant 0 : index
    %24 = vector.load %arg7[%c0_14, %c0_15] : memref<2x512xf32, #tpu.memory_space<vmem>>, vector<2x512xf32>
    tpu.vector_store %arg7[%c0_14, %c0_15], %23 {strides = array<i32>} : memref<2x512xf32, #tpu.memory_space<vmem>>, vector<2x512xf32>,
    return
  }
  func.func @transform_0(%arg0: i32) -> (i32, i32) {
    %c0_i32 = arith.constant 0 : i32
    %c0_i32_0 = arith.constant 0 : i32
    return %c0_i32, %arg0 : i32, i32
  }
  func.func @transform_1(%arg0: i32) -> (i32, i32) {
    %c0_i32 = arith.constant 0 : i32
    %c0_i32_0 = arith.constant 0 : i32
    %c0_i32_1 = arith.constant 0 : i32
    return %c0_i32, %c0_i32_0 : i32, i32
  }
  func.func @transform_2(%arg0: i32) -> (i32, i32) {
    %c0_i32 = arith.constant 0 : i32
    %c0_i32_0 = arith.constant 0 : i32
    %c0_i32_1 = arith.constant 0 : i32
    return %c0_i32, %c0_i32_0 : i32, i32
  }
  func.func @transform_3(%arg0: i32) -> (i32, i32) {
    %c0_i32 = arith.constant 0 : i32
    %c0_i32_0 = arith.constant 0 : i32
    %c0_i32_1 = arith.constant 0 : i32
    return %c0_i32, %c0_i32_0 : i32, i32
  }
  func.func @transform_4(%arg0: i32) -> (i32, i32) {
    %c0_i32 = arith.constant 0 : i32
    %c0_i32_0 = arith.constant 0 : i32
    %c0_i32_1 = arith.constant 0 : i32
    return %c0_i32, %c0_i32_0 : i32, i32
  }
  func.func @transform_5(%arg0: i32) -> (i32, i32) {
    %c0_i32 = arith.constant 0 : i32
    %c0_i32_0 = arith.constant 0 : i32
    %c0_i32_1 = arith.constant 0 : i32
    return %c0_i32, %c0_i32_0 : i32, i32
  }
  func.func @transform_6(%arg0: i32) -> (i32, i32) {
    %c0_i32 = arith.constant 0 : i32
    %c0_i32_0 = arith.constant 0 : i32
    return %c0_i32, %arg0 : i32, i32
  }
}

</mosaic_0001>

<llo_original>
// kernel: tpu_custom_call.1
$region0: #{tpu_custom_call.1}
  #allocation0 [shape = 'u32[]', space=smem, size = 0x4, offset = 0x4, fixed_abs, tag = 'smem constant byte address 0x4 - core index']
  #allocation1 [shape = 'u32[144,128]{1,0:T(1,128)}', space=vmem, size = 0x12000, scoped, tag = 'internal scratch']
  %s0 = inlined_call_operand.hbm [shape: f32[32,512], index: 0, kind: input, shape index: {}]
  %s1 = inlined_call_operand.vmem [shape: f32[32,1], index: 1, kind: input, shape index: {}]
  %s2 = inlined_call_operand.vmem [shape: f32[32,1], index: 2, kind: input, shape index: {}]
  %s3 = inlined_call_operand.vmem [shape: f32[32,1], index: 3, kind: input, shape index: {}]
  %s4 = inlined_call_operand.vmem [shape: f32[2,32], index: 4, kind: input, shape index: {}]
  %s5 = inlined_call_operand.vmem [shape: f32[2,1], index: 5, kind: input, shape index: {}]
  %s6 = inlined_call_operand.hbm [shape: f32[2,512], index: 6, kind: output, shape index: {}]
  %s7 = sld [smem:[#allocation0]]
  $region38: #{tpu_custom_call.1} parent=0
    _
  %s9 = ssub.s32 1, %s7
  %s10 = scalar_select 0, %s9, %s7
  $region1: #{tpu_custom_call.1} parent=0
    #allocation2 [shape = 'u8[65536]{0}', space=vmem, size = 0x10000, scoped, tag = 'input window, operand 0, single buffered']
    #allocation3 [shape = 's32[1]{0}', space=sflag, size = 0x4, scoped, tag = 'scoped memory for tpu_custom_call.1']
    #allocation4 [shape = 's32[1]{0}', space=sflag, size = 0x4, scoped, tag = 'scoped memory for tpu_custom_call.1']
    #allocation5 [shape = 'u8[4096]{0}', space=vmem, size = 0x1000, scoped, tag = 'output window, operand 0, single buffered']
    %11 = vsyncpa [#allocation3], 0
    %12 = vsyncpa [#allocation4], 0
    // Predicated region
    $region2: #{tpu_custom_call.1} parent=1 // pred_check
      _
    $region3: #{tpu_custom_call.1} parent=1 // pred_check_branch
      %14 = sbr.rel (0) target = $region5
    $region4: #{tpu_custom_call.1} parent=1 // pred_region
      %s16 = ssub.s32 2048, 2048
      %17 = vsyncadd [#allocation3], %s16
      %s18 = sshll.u32 [#allocation2], 4
      %s19 = int_to_ptr.vmem [resolvable:$true] %s18
      %24 = dma.hbm_to_vmem [thread:$0]  %s0, 2048, %s19, [#allocation3], 512, 512, 32
    $region5: #{tpu_custom_call.1} parent=1 // pred_fallthru
      _
    // Predicated region
    $region6: #{tpu_custom_call.1} parent=1 // pred_check
      _
    $region7: #{tpu_custom_call.1} parent=1 // pred_check_branch
      %26 = sbr.rel (0) target = $region9
    $region8: #{tpu_custom_call.1} parent=1 // pred_region
      _
    $region9: #{tpu_custom_call.1} parent=1 // pred_fallthru
      _
    // Predicated region
    $region10: #{tpu_custom_call.1} parent=1 // pred_check
      _
    $region11: #{tpu_custom_call.1} parent=1 // pred_check_branch
      %28 = sbr.rel (0) target = $region13
    $region12: #{tpu_custom_call.1} parent=1 // pred_region
      _
    $region13: #{tpu_custom_call.1} parent=1 // pred_fallthru
      _
    // Predicated region
    $region14: #{tpu_custom_call.1} parent=1 // pred_check
      _
    $region15: #{tpu_custom_call.1} parent=1 // pred_check_branch
      %30 = sbr.rel (0) target = $region17
    $region16: #{tpu_custom_call.1} parent=1 // pred_region
      _
    $region17: #{tpu_custom_call.1} parent=1 // pred_fallthru
      _
    // Predicated region
    $region18: #{tpu_custom_call.1} parent=1 // pred_check
      _
    $region19: #{tpu_custom_call.1} parent=1 // pred_check_branch
      %32 = sbr.rel (0) target = $region21
    $region20: #{tpu_custom_call.1} parent=1 // pred_region
      _
    $region21: #{tpu_custom_call.1} parent=1 // pred_fallthru
      _
    // Predicated region
    $region22: #{tpu_custom_call.1} parent=1 // pred_check
      _
    $region23: #{tpu_custom_call.1} parent=1 // pred_check_branch
      %34 = sbr.rel (0) target = $region25
    $region24: #{tpu_custom_call.1} parent=1 // pred_region
      _
    $region25: #{tpu_custom_call.1} parent=1 // pred_fallthru
      _
    // Predicated region
    $region26: #{tpu_custom_call.1} parent=1 // pred_check
      _
    $region27: #{tpu_custom_call.1} parent=1 // pred_check_branch
      %36 = sbr.rel (0) target = $region29
    $region28: #{tpu_custom_call.1} parent=1 // pred_region
      %37 = dma.done [#allocation3], 2048
    $region29: #{tpu_custom_call.1} parent=1 // pred_fallthru
      _
    %v38 = vld [vmem:[#allocation2] sm:$0xff]
    %v39 = vld [vmem:[#allocation2 + $0x8] sm:$0xff]
    %v40 = vld [vmem:[#allocation2 + $0x10] sm:$0xff]
    %v41 = vld [vmem:[#allocation2 + $0x18] sm:$0xff]
    %v42 = vld [vmem:[#allocation2 + $0x20] sm:$0xff]
    %v43 = vld [vmem:[#allocation2 + $0x28] sm:$0xff]
    %v44 = vld [vmem:[#allocation2 + $0x30] sm:$0xff]
    %v45 = vld [vmem:[#allocation2 + $0x38] sm:$0xff]
    %v46 = vld [vmem:[#allocation2 + $0x40] sm:$0xff]
    %v47 = vld [vmem:[#allocation2 + $0x48] sm:$0xff]
    %v48 = vld [vmem:[#allocation2 + $0x50] sm:$0xff]
    %v49 = vld [vmem:[#allocation2 + $0x58] sm:$0xff]
    %v50 = vld [vmem:[#allocation2 + $0x60] sm:$0xff]
    %v51 = vld [vmem:[#allocation2 + $0x68] sm:$0xff]
    %v52 = vld [vmem:[#allocation2 + $0x70] sm:$0xff]
    %v53 = vld [vmem:[#allocation2 + $0x78] sm:$0xff]
    %v54 = vld [vmem:[%s1] sm:$0xff]
    %v55 = vld [vmem:[%s1 + $0x8] sm:$0xff]
    %v56 = vld [vmem:[%s1 + $0x10] sm:$0xff]
    %v57 = vld [vmem:[%s1 + $0x18] sm:$0xff]
    %59 = vset.pattern.permute.xlu0 0
    %60 = vperm.xlu0 %59, %v54
    %v61 = vpop.permute.xlu0 %60
    %64 = vset.pattern.permute.xlu0 0
    %65 = vperm.xlu0 %64, %v55
    %v66 = vpop.permute.xlu0 %65
    %69 = vset.pattern.permute.xlu0 0
    %70 = vperm.xlu0 %69, %v56
    %v71 = vpop.permute.xlu0 %70
    %74 = vset.pattern.permute.xlu0 0
    %75 = vperm.xlu0 %74, %v57
    %v76 = vpop.permute.xlu0 %75
    %v78 = vmul.f32 %v38, %v61
    %v79 = vmul.f32 %v39, %v61
    %v80 = vmul.f32 %v40, %v61
    %v81 = vmul.f32 %v41, %v61
    %v82 = vmul.f32 %v42, %v66
    %v83 = vmul.f32 %v43, %v66
    %v84 = vmul.f32 %v44, %v66
    %v85 = vmul.f32 %v45, %v66
    %v86 = vmul.f32 %v46, %v71
    %v87 = vmul.f32 %v47, %v71
    %v88 = vmul.f32 %v48, %v71
    %v89 = vmul.f32 %v49, %v71
    %v90 = vmul.f32 %v50, %v76
    %v91 = vmul.f32 %v51, %v76
    %v92 = vmul.f32 %v52, %v76
    %v93 = vmul.f32 %v53, %v76
    %v94 = vadd.f32 %v78, %v82
    %v95 = vadd.f32 %v94, %v86
    %v96 = vadd.f32 %v95, %v90
    %v97 = vrot.slane %v96, 4
    %v98 = vadd.f32 %v96, %v97
    %v99 = vrot.slane %v98, 2
    %v100 = vadd.f32 %v98, %v99
    %v101 = vrot.slane %v100, 1
    %v102 = vadd.f32 %v100, %v101
    %v103 = vadd.f32 %v79, %v83
    %v104 = vadd.f32 %v103, %v87
    %v105 = vadd.f32 %v104, %v91
    %v106 = vrot.slane %v105, 4
    %v107 = vadd.f32 %v105, %v106
    %v108 = vrot.slane %v107, 2
    %v109 = vadd.f32 %v107, %v108
    %v110 = vrot.slane %v109, 1
    %v111 = vadd.f32 %v109, %v110
    %v112 = vadd.f32 %v80, %v84
    %v113 = vadd.f32 %v112, %v88
    %v114 = vadd.f32 %v113, %v92
    %v115 = vrot.slane %v114, 4
    %v116 = vadd.f32 %v114, %v115
    %v117 = vrot.slane %v116, 2
    %v118 = vadd.f32 %v116, %v117
    %v119 = vrot.slane %v118, 1
    %v120 = vadd.f32 %v118, %v119
    %v121 = vadd.f32 %v81, %v85
    %v122 = vadd.f32 %v121, %v89
    %v123 = vadd.f32 %v122, %v93
    %v124 = vrot.slane %v123, 4
    %v125 = vadd.f32 %v123, %v124
    %v126 = vrot.slane %v125, 2
    %v127 = vadd.f32 %v125, %v126
    %v128 = vrot.slane %v127, 1
    %v129 = vadd.f32 %v127, %v128
    %v130 = vld [vmem:[%s2] sm:$0xff]
    %v131 = vld [vmem:[%s2 + $0x8] sm:$0xff]
    %v132 = vld [vmem:[%s2 + $0x10] sm:$0xff]
    %v133 = vld [vmem:[%s2 + $0x18] sm:$0xff]
    %135 = vset.pattern.permute.xlu0 0
    %136 = vperm.xlu0 %135, %v130
    %v137 = vpop.permute.xlu0 %136
    %140 = vset.pattern.permute.xlu0 0
    %141 = vperm.xlu0 %140, %v131
    %v142 = vpop.permute.xlu0 %141
    %145 = vset.pattern.permute.xlu0 0
    %146 = vperm.xlu0 %145, %v132
    %v147 = vpop.permute.xlu0 %146
    %150 = vset.pattern.permute.xlu0 0
    %151 = vperm.xlu0 %150, %v133
    %v152 = vpop.permute.xlu0 %151
    %v154 = vmul.f32 %v137, %v102
    %v155 = vmul.f32 %v137, %v111
    %v156 = vmul.f32 %v137, %v120
    %v157 = vmul.f32 %v137, %v129
    %v158 = vmul.f32 %v142, %v102
    %v159 = vmul.f32 %v142, %v111
    %v160 = vmul.f32 %v142, %v120
    %v161 = vmul.f32 %v142, %v129
    %v162 = vmul.f32 %v147, %v102
    %v163 = vmul.f32 %v147, %v111
    %v164 = vmul.f32 %v147, %v120
    %v165 = vmul.f32 %v147, %v129
    %v166 = vmul.f32 %v152, %v102
    %v167 = vmul.f32 %v152, %v111
    %v168 = vmul.f32 %v152, %v120
    %v169 = vmul.f32 %v152, %v129
    %v170 = vld [vmem:[%s3] sm:$0xff]
    %v171 = vld [vmem:[%s3 + $0x8] sm:$0xff]
    %v172 = vld [vmem:[%s3 + $0x10] sm:$0xff]
    %v173 = vld [vmem:[%s3 + $0x18] sm:$0xff]
    %175 = vset.pattern.permute.xlu0 0
    %176 = vperm.xlu0 %175, %v170
    %v177 = vpop.permute.xlu0 %176
    %180 = vset.pattern.permute.xlu0 0
    %181 = vperm.xlu0 %180, %v171
    %v182 = vpop.permute.xlu0 %181
    %185 = vset.pattern.permute.xlu0 0
    %186 = vperm.xlu0 %185, %v172
    %v187 = vpop.permute.xlu0 %186
    %190 = vset.pattern.permute.xlu0 0
    %191 = vperm.xlu0 %190, %v173
    %v192 = vpop.permute.xlu0 %191
    %v194 = vadd.f32 %v154, %v177
    %v195 = vadd.f32 %v155, %v177
    %v196 = vadd.f32 %v156, %v177
    %v197 = vadd.f32 %v157, %v177
    %v198 = vadd.f32 %v158, %v182
    %v199 = vadd.f32 %v159, %v182
    %v200 = vadd.f32 %v160, %v182
    %v201 = vadd.f32 %v161, %v182
    %v202 = vadd.f32 %v162, %v187
    %v203 = vadd.f32 %v163, %v187
    %v204 = vadd.f32 %v164, %v187
    %v205 = vadd.f32 %v165, %v187
    %v206 = vadd.f32 %v166, %v192
    %v207 = vadd.f32 %v167, %v192
    %v208 = vadd.f32 %v168, %v192
    %v209 = vadd.f32 %v169, %v192
    %vm210 = vcmp.gt.f32.partialorder %v194, 0.0
    %vm211 = vcmp.gt.f32.partialorder %v195, 0.0
    %vm212 = vcmp.gt.f32.partialorder %v196, 0.0
    %vm213 = vcmp.gt.f32.partialorder %v197, 0.0
    %vm214 = vcmp.gt.f32.partialorder %v198, 0.0
    %vm215 = vcmp.gt.f32.partialorder %v199, 0.0
    %vm216 = vcmp.gt.f32.partialorder %v200, 0.0
    %vm217 = vcmp.gt.f32.partialorder %v201, 0.0
    %vm218 = vcmp.gt.f32.partialorder %v202, 0.0
    %vm219 = vcmp.gt.f32.partialorder %v203, 0.0
    %vm220 = vcmp.gt.f32.partialorder %v204, 0.0
    %vm221 = vcmp.gt.f32.partialorder %v205, 0.0
    %vm222 = vcmp.gt.f32.partialorder %v206, 0.0
    %vm223 = vcmp.gt.f32.partialorder %v207, 0.0
    %vm224 = vcmp.gt.f32.partialorder %v208, 0.0
    %vm225 = vcmp.gt.f32.partialorder %v209, 0.0
    %v226 = vmul.f32 %v194, 1.442695
    %v227 = vpow.pop %v226
    %v228 = vmul.f32 %v195, 1.442695
    %v229 = vpow.pop %v228
    %v230 = vmul.f32 %v196, 1.442695
    %v231 = vpow.pop %v230
    %v232 = vmul.f32 %v197, 1.442695
    %v233 = vpow.pop %v232
    %v234 = vmul.f32 %v198, 1.442695
    %v235 = vpow.pop %v234
    %v236 = vmul.f32 %v199, 1.442695
    %v237 = vpow.pop %v236
    %v238 = vmul.f32 %v200, 1.442695
    %v239 = vpow.pop %v238
    %v240 = vmul.f32 %v201, 1.442695
    %v241 = vpow.pop %v240
    %v242 = vmul.f32 %v202, 1.442695
    %v243 = vpow.pop %v242
    %v244 = vmul.f32 %v203, 1.442695
    %v245 = vpow.pop %v244
    %v246 = vmul.f32 %v204, 1.442695
    %v247 = vpow.pop %v246
    %v248 = vmul.f32 %v205, 1.442695
    %v249 = vpow.pop %v248
    %v250 = vmul.f32 %v206, 1.442695
    %v251 = vpow.pop %v250
    %v252 = vmul.f32 %v207, 1.442695
    %v253 = vpow.pop %v252
    %v254 = vmul.f32 %v208, 1.442695
    %v255 = vpow.pop %v254
    %v256 = vmul.f32 %v209, 1.442695
    %v257 = vpow.pop %v256
    %v258 = vsub.f32 %v227, 1.0
    %v259 = vsub.f32 %v229, 1.0
    %v260 = vsub.f32 %v231, 1.0
    %v261 = vsub.f32 %v233, 1.0
    %v262 = vsub.f32 %v235, 1.0
    %v263 = vsub.f32 %v237, 1.0
    %v264 = vsub.f32 %v239, 1.0
    %v265 = vsub.f32 %v241, 1.0
    %v266 = vsub.f32 %v243, 1.0
    %v267 = vsub.f32 %v245, 1.0
    %v268 = vsub.f32 %v247, 1.0
    %v269 = vsub.f32 %v249, 1.0
    %v270 = vsub.f32 %v251, 1.0
    %v271 = vsub.f32 %v253, 1.0
    %v272 = vsub.f32 %v255, 1.0
    %v273 = vsub.f32 %v257, 1.0
    %v274 = vsel %vm210, %v194, %v258
    %v275 = vsel %vm211, %v195, %v259
    %v276 = vsel %vm212, %v196, %v260
    %v277 = vsel %vm213, %v197, %v261
    %v278 = vsel %vm214, %v198, %v262
    %v279 = vsel %vm215, %v199, %v263
    %v280 = vsel %vm216, %v200, %v264
    %v281 = vsel %vm217, %v201, %v265
    %v282 = vsel %vm218, %v202, %v266
    %v283 = vsel %vm219, %v203, %v267
    %v284 = vsel %vm220, %v204, %v268
    %v285 = vsel %vm221, %v205, %v269
    %v286 = vsel %vm222, %v206, %v270
    %v287 = vsel %vm223, %v207, %v271
    %v288 = vsel %vm224, %v208, %v272
    %v289 = vsel %vm225, %v209, %v273
    %v290 = vld [vmem:[%s4] sm:$0x3]
    %v291 = vld [vmem:[%s5] sm:$0x3]
    %293 = vset.pattern.permute.xlu0 0
    %294 = vperm.xlu0 %293, %v291
    %v295 = vpop.permute.xlu0 %294
    %vm297 = vcmask 261120
    %v299 = vsel %vm297, %v290, 0
    %301 = vmatprep.subr.mxu0 0.0
    %302 = vmatpush1.msra.mxu0 0.0
    %303 = vmatprep.subr.mxu0 0.0
    %304 = vmatpush1.msra.mxu0 0.0
    %305 = vmatprep.subr.mxu0 0.0
    %306 = vmatpush1.msra.mxu0 0.0
    %307 = vmatprep.subr.mxu0 0.0
    %308 = vmatpush1.msra.mxu0 0.0
    %309 = vmatprep.subr.mxu0 0.0
    %310 = vmatpush1.msra.mxu0 0.0
    %311 = vmatprep.subr.mxu0 0.0
    %312 = vmatpush1.msra.mxu0 0.0
    %313 = vmatprep.subr.mxu0 0.0
    %314 = vmatpush1.msra.mxu0 0.0
    %315 = vmatprep.subr.mxu0 0.0
    %316 = vmatpush1.msra.mxu0 0.0
    %317 = vmatprep.subr.mxu0 0.0
    %318 = vmatpush1.msra.mxu0 0.0
    %319 = vmatprep.subr.mxu0 0.0
    %320 = vmatpush1.msra.mxu0 0.0
    %321 = vmatprep.subr.mxu0 0.0
    %322 = vmatpush1.msra.mxu0 0.0
    %323 = vmatprep.subr.mxu0 0.0
    %324 = vmatpush1.msra.mxu0 0.0
    %325 = vmatprep.subr.mxu0 %v287
    %326 = vmatpush1.msra.mxu0 %v286
    %327 = vmatprep.subr.mxu0 %v283
    %328 = vmatpush1.msra.mxu0 %v282
    %329 = vmatprep.subr.mxu0 %v279
    %330 = vmatpush1.msra.mxu0 %v278
    %331 = vmatprep.subr.mxu0 %v275
    %332 = vmatpush1.msra.mxu0 %v274
    %333 = vmatprep.subr.mxu0 0.0
    %334 = vmatpush2.msra.mxu0 0.0
    %335 = vmatprep.subr.mxu0 0.0
    %336 = vmatpush2.msra.mxu0 0.0
    %337 = vmatprep.subr.mxu0 0.0
    %338 = vmatpush2.msra.mxu0 0.0
    %339 = vmatprep.subr.mxu0 0.0
    %340 = vmatpush2.msra.mxu0 0.0
    %341 = vmatprep.subr.mxu0 0.0
    %342 = vmatpush2.msra.mxu0 0.0
    %343 = vmatprep.subr.mxu0 0.0
    %344 = vmatpush2.msra.mxu0 0.0
    %345 = vmatprep.subr.mxu0 0.0
    %346 = vmatpush2.msra.mxu0 0.0
    %347 = vmatprep.subr.mxu0 0.0
    %348 = vmatpush2.msra.mxu0 0.0
    %349 = vmatprep.subr.mxu0 0.0
    %350 = vmatpush2.msra.mxu0 0.0
    %351 = vmatprep.subr.mxu0 0.0
    %352 = vmatpush2.msra.mxu0 0.0
    %353 = vmatprep.subr.mxu0 0.0
    %354 = vmatpush2.msra.mxu0 0.0
    %355 = vmatprep.subr.mxu0 0.0
    %356 = vmatpush2.msra.mxu0 0.0
    %357 = vmatprep.subr.mxu0 0.0
    %358 = vmatpush2.msra.mxu0 0.0
    %359 = vmatprep.subr.mxu0 0.0
    %360 = vmatpush2.msra.mxu0 0.0
    %361 = vmatprep.subr.mxu0 0.0
    %362 = vmatpush2.msra.mxu0 0.0
    %363 = vmatprep.subr.mxu0 0.0
    %364 = vmatpush2.msra.mxu0 0.0
    %365 = vmatprep.mubr.f32.mxu0 0.0
    %366 = vmatmul.mubr.f32.gmra.mxu0 %v299
    %v367 = vpop.f32.mrf.mxu0
    %v368 = vadd.f32 %v295, %v367
    %v369 = vpop.f32.mrf.mxu0
    %v370 = vadd.f32 %v295, %v369
    %371 = vdwg.mxu0
    %372 = vmatprep.subr.mxu0 0.0
    %373 = vmatpush1.msra.mxu0 0.0
    %374 = vmatprep.subr.mxu0 0.0
    %375 = vmatpush1.msra.mxu0 0.0
    %376 = vmatprep.subr.mxu0 0.0
    %377 = vmatpush1.msra.mxu0 0.0
    %378 = vmatprep.subr.mxu0 0.0
    %379 = vmatpush1.msra.mxu0 0.0
    %380 = vmatprep.subr.mxu0 0.0
    %381 = vmatpush1.msra.mxu0 0.0
    %382 = vmatprep.subr.mxu0 0.0
    %383 = vmatpush1.msra.mxu0 0.0
    %384 = vmatprep.subr.mxu0 0.0
    %385 = vmatpush1.msra.mxu0 0.0
    %386 = vmatprep.subr.mxu0 0.0
    %387 = vmatpush1.msra.mxu0 0.0
    %388 = vmatprep.subr.mxu0 0.0
    %389 = vmatpush1.msra.mxu0 0.0
    %390 = vmatprep.subr.mxu0 0.0
    %391 = vmatpush1.msra.mxu0 0.0
    %392 = vmatprep.subr.mxu0 0.0
    %393 = vmatpush1.msra.mxu0 0.0
    %394 = vmatprep.subr.mxu0 0.0
    %395 = vmatpush1.msra.mxu0 0.0
    %396 = vmatprep.subr.mxu0 %v289
    %397 = vmatpush1.msra.mxu0 %v288
    %398 = vmatprep.subr.mxu0 %v285
    %399 = vmatpush1.msra.mxu0 %v284
    %400 = vmatprep.subr.mxu0 %v281
    %401 = vmatpush1.msra.mxu0 %v280
    %402 = vmatprep.subr.mxu0 %v277
    %403 = vmatpush1.msra.mxu0 %v276
    %404 = vmatprep.subr.mxu0 0.0
    %405 = vmatpush2.msra.mxu0 0.0
    %406 = vmatprep.subr.mxu0 0.0
    %407 = vmatpush2.msra.mxu0 0.0
    %408 = vmatprep.subr.mxu0 0.0
    %409 = vmatpush2.msra.mxu0 0.0
    %410 = vmatprep.subr.mxu0 0.0
    %411 = vmatpush2.msra.mxu0 0.0
    %412 = vmatprep.subr.mxu0 0.0
    %413 = vmatpush2.msra.mxu0 0.0
    %414 = vmatprep.subr.mxu0 0.0
    %415 = vmatpush2.msra.mxu0 0.0
    %416 = vmatprep.subr.mxu0 0.0
    %417 = vmatpush2.msra.mxu0 0.0
    %418 = vmatprep.subr.mxu0 0.0
    %419 = vmatpush2.msra.mxu0 0.0
    %420 = vmatprep.subr.mxu0 0.0
    %421 = vmatpush2.msra.mxu0 0.0
    %422 = vmatprep.subr.mxu0 0.0
    %423 = vmatpush2.msra.mxu0 0.0
    %424 = vmatprep.subr.mxu0 0.0
    %425 = vmatpush2.msra.mxu0 0.0
    %426 = vmatprep.subr.mxu0 0.0
    %427 = vmatpush2.msra.mxu0 0.0
    %428 = vmatprep.subr.mxu0 0.0
    %429 = vmatpush2.msra.mxu0 0.0
    %430 = vmatprep.subr.mxu0 0.0
    %431 = vmatpush2.msra.mxu0 0.0
    %432 = vmatprep.subr.mxu0 0.0
    %433 = vmatpush2.msra.mxu0 0.0
    %434 = vmatprep.subr.mxu0 0.0
    %435 = vmatpush2.msra.mxu0 0.0
    %436 = vmatprep.mubr.f32.mxu0 0.0
    %437 = vmatmul.mubr.f32.gmra.mxu0 %v299
    %v438 = vpop.f32.mrf.mxu0
    %v439 = vadd.f32 %v295, %v438
    %v440 = vpop.f32.mrf.mxu0
    %v441 = vadd.f32 %v295, %v440
    %442 = vdwg.mxu0
    %v447 = vcombine.low %v368, %v370
    %v448 = vcombine.low %v439, %v441
    %v450 = vunpack.c.l.s4 1983009808
    %v451 = vunpack.c.0.s8 %v450
    %v452 = vlaneseq
    %v453 = vshrl.u32 %v452, 7
    %v454 = vsub.s32 %v451, %v453
    %v455 = vrot.slane %v447, %v454
    %v457 = vunpack.c.l.s4 1983009808
    %v458 = vunpack.c.0.s8 %v457
    %v459 = vlaneseq
    %v460 = vshrl.u32 %v459, 7
    %v461 = vsub.s32 %v458, %v460
    %v462 = vrot.slane %v448, %v461
    %v463 = vcombine.low %v455, %v462
    %465 = vst [vmem:[#allocation5] sm:$0xff] %v463
    // Predicated region
    $region30: #{tpu_custom_call.1} parent=1 // pred_check
      _
    $region31: #{tpu_custom_call.1} parent=1 // pred_check_branch
      %467 = sbr.rel (0) target = $region33
    $region32: #{tpu_custom_call.1} parent=1 // pred_region
      %s469 = ssub.s32 128, 128
      %470 = vsyncadd [#allocation4], %s469
      %s472 = sshll.u32 [#allocation5], 4
      %s473 = int_to_ptr.vmem [resolvable:$true] %s472
      %475 = dma.vmem_to_hbm [thread:$0]  %s473, 128, %s6, [#allocation4]
    $region33: #{tpu_custom_call.1} parent=1 // pred_fallthru
      _
    // Predicated region
    $region34: #{tpu_custom_call.1} parent=1 // pred_check
      _
    $region35: #{tpu_custom_call.1} parent=1 // pred_check_branch
      %477 = sbr.rel (0) target = $region37
    $region36: #{tpu_custom_call.1} parent=1 // pred_region
      %478 = dma.done [#allocation4], 128
    $region37: #{tpu_custom_call.1} parent=1 // pred_fallthru
      _
    %479 = vsyncpa [#allocation3], 1
    %480 = vsyncpa [#allocation4], 1

</llo_original>
